<compile_context>
chip_gen: v7x
topology: tpu7x:2x2x1
jax: 0.10.0
libtpu: 0.0.40
codegen_flags: <defaults>
</compile_context>

<pallas_src>
import functools

import jax
import jax.numpy as jnp
from jax.experimental import pallas as pl
from jax.experimental.pallas import tpu as pltpu


# --------------------------------------------------------------------------
# Kernel
# --------------------------------------------------------------------------
def _classifier_head_kernel(x_ref, w1_ref, b1_ref, w2_ref, b2_ref, o_ref,
                            acc_ref, *, multi_h):
    """Grid = (n_h, n_k).

    h (axis 0, "parallel")  : block of the hidden dim (only >1 on v7x)
    k (axis 1, "arbitrary") : tile of the big reduction dim D

    acc_ref: (B, th) f32 accumulator holding this h-block's hidden
    activations across the k reduction.
    """
    k = pl.program_id(1)

    # Fold the first bias into the accumulator init (direct broadcast store).
    @pl.when(k == 0)
    def _init():
        acc_ref[...] = jnp.broadcast_to(b1_ref[...], acc_ref.shape)

    # (B, tk) @ (tk, th) on the MXU, f32 accumulation.
    acc_ref[...] += jnp.dot(x_ref[...], w1_ref[...],
                            preferred_element_type=jnp.float32)

    # Second (tiny) matmul + bias + store only on the last reduction step.
    @pl.when(k == pl.num_programs(1) - 1)
    def _finalize():
        h = acc_ref[...].astype(w2_ref.dtype)
        logits = jnp.dot(h, w2_ref[...], preferred_element_type=jnp.float32)
        logits = logits + b2_ref[...]          # b2 pre-scaled by 1/n_h
        if multi_h:
            o_ref[0] = logits.astype(o_ref.dtype)
        else:
            o_ref[...] = logits.astype(o_ref.dtype)


# --------------------------------------------------------------------------
# Hardware-aware sizing
# --------------------------------------------------------------------------
def _hw_budgets():
    """Returns (w1 double-buffer byte budget, vmem_limit cap, multi_core)."""
    try:
        kind = jax.devices()[0].device_kind.lower()
    except Exception:
        kind = ""
    if "v7" in kind:
        # 64 MiB physical VMEM, 2 TensorCores per chip.
        return 20 << 20, 48 << 20, True
    if "v6" in kind:
        return 24 << 20, 100 << 20, False
    if "v5" in kind:
        return 12 << 20, 100 << 20, False
    # Unknown backend: conservative.
    return 12 << 20, 64 << 20, False


def _round_up(x, m):
    return -(-x // m) * m


# --------------------------------------------------------------------------
# One-time parameter preparation (bf16 cast, padding, bias pre-scale)
# --------------------------------------------------------------------------
def prepare_params(w1, b1, w2, b2, *, tk=None):
    """One-time prep of the classifier head parameters.

    w1: (D, H), b1: (1, H), w2: (H, C), b2: (1, C)  (weights = torch weight.T)
    Returns (params dict of device arrays, static config dict).
    """
    D, H = w1.shape
    C = w2.shape[1]
    assert b1.shape == (1, H) and w2.shape == (H, C) and b2.shape == (1, C)

    w1_budget, vmem_cap, multi_core = _hw_budgets()

    # Hidden-dim split only when there are multiple TensorCores (v7x) and it
    # divides cleanly; on single-TC chips it is pure overhead.
    n_h = 2 if (multi_core and H % 256 == 0) else 1
    th = H // n_h

    # Pad the reduction dim to a lane-dense multiple of 128.
    D_pad = _round_up(D, 128)

    # Size tk so the w1 double buffer (2 * tk * th * 2 bytes) fits the budget.
    if tk is None:
        tk_target = max(128, (w1_budget // (4 * th)) // 128 * 128)
        tk_target = min(tk_target, D_pad)
        tk = 128
        cand = tk_target
        while cand >= 128:
            if D_pad % cand == 0:
                tk = cand
                break
            cand -= 128
    assert tk % 128 == 0 and D_pad % tk == 0

    # Pad num_class to a lane-dense multiple of 128 (unmasked final store).
    C_pad = _round_up(C, 128)

    # Persist bf16 weight streams (MXU native, half the HBM bytes).
    w1p = jnp.pad(w1, ((0, D_pad - D), (0, 0))).astype(jnp.bfloat16)
    w2p = jnp.pad(w2, ((0, 0), (0, C_pad - C))).astype(jnp.bfloat16)
    b1f = b1.astype(jnp.float32)
    # b2 is added once per h-block and the partials are summed -> pre-scale.
    b2f = (jnp.pad(b2, ((0, 0), (0, C_pad - C))) / float(n_h)).astype(jnp.float32)

    params = {"w1": w1p, "b1": b1f, "w2": w2p, "b2": b2f}
    cfg = {"D": D, "D_pad": D_pad, "H": H, "C": C, "C_pad": C_pad,
           "n_h": n_h, "th": th, "tk": tk, "vmem_cap": vmem_cap}
    return params, cfg


# --------------------------------------------------------------------------
# Wrapper
# --------------------------------------------------------------------------
def classifier_head(x, params, cfg):
    """Fused Linear(D, H) -> Linear(H, C) logits head. x: (B, D) f32."""
    B, D = x.shape
    assert D == cfg["D"]
    D_pad, tk, th = cfg["D_pad"], cfg["tk"], cfg["th"]
    n_h, C, C_pad = cfg["n_h"], cfg["C"], cfg["C_pad"]
    n_k = D_pad // tk
    multi_h = n_h > 1

    # Activations are tiny (B ~ 2): per-call bf16 cast + D padding is cheap.
    xb = x.astype(jnp.bfloat16)
    if D_pad != D:
        xb = jnp.pad(xb, ((0, 0), (0, D_pad - D)))

    # Explicit VMEM accounting (double-buffered inputs + accumulator + out).
    w1_buf = 2 * tk * th * 2
    x_buf = 2 * B * tk * 2
    w2_buf = 2 * th * C_pad * 2
    b_buf = 2 * (th + C_pad) * 4
    acc_buf = B * th * 4
    out_buf = 2 * B * C_pad * 4
    needed = w1_buf + x_buf + w2_buf + b_buf + acc_buf + out_buf
    vmem_bytes = int(min(cfg["vmem_cap"],
                         max(32 << 20, needed * 3 // 2 + (2 << 20))))

    in_specs = [
        pl.BlockSpec((B, tk), lambda h, k: (0, k)),       # x
        pl.BlockSpec((tk, th), lambda h, k: (k, h)),      # w1 (streamed)
        pl.BlockSpec((1, th), lambda h, k: (0, h)),       # b1
        pl.BlockSpec((th, C_pad), lambda h, k: (h, 0)),   # w2
        pl.BlockSpec((1, C_pad), lambda h, k: (0, 0)),    # b2
    ]

    if multi_h:
        out_shape = jax.ShapeDtypeStruct((n_h, B, C_pad), jnp.float32)
        out_specs = pl.BlockSpec((1, B, C_pad), lambda h, k: (h, 0, 0))
    else:
        out_shape = jax.ShapeDtypeStruct((B, C_pad), jnp.float32)
        out_specs = pl.BlockSpec((B, C_pad), lambda h, k: (0, 0))

    kernel = functools.partial(_classifier_head_kernel, multi_h=multi_h)

    out = pl.pallas_call(
        kernel,
        out_shape=out_shape,
        grid_spec=pltpu.PrefetchScalarGridSpec(
            num_scalar_prefetch=0,
            grid=(n_h, n_k),                               # reduction last
            in_specs=in_specs,
            out_specs=out_specs,
            scratch_shapes=[pltpu.VMEM((B, th), jnp.float32)],
        ),
        compiler_params=pltpu.CompilerParams(
            dimension_semantics=("parallel", "arbitrary"),
            vmem_limit_bytes=vmem_bytes,
        ),
    )(xb, params["w1"], params["b1"], params["w2"], params["b2"])

    if multi_h:
        out = jnp.sum(out, axis=0)                         # sum h-block partials
    return out[:, :C]                                      # drop class padding


def classifier_forward(query_output, params, cfg):
    """Mirrors Classifier.forward after forward_image.

    query_output: (bs, num_query_tokens, qformer_hidden_dim)
    returns logits: (bs, num_class)
    """
    bs = query_output.shape[0]
    img_features = query_output.reshape(bs, -1)            # .view(bs, -1)
    return classifier_head(img_features, params, cfg)


# --------------------------------------------------------------------------
# Deterministic synthetic init (nn.Linear-shaped, stored transposed)
# --------------------------------------------------------------------------
def init_raw_params(key, img_feat_dim, hidden_dim, num_class):
    k1, k2, k3, k4 = jax.random.split(key, 4)
    s1 = 1.0 / jnp.sqrt(img_feat_dim)
    s2 = 1.0 / jnp.sqrt(hidden_dim)
    return {
        "w1": jax.random.uniform(k1, (img_feat_dim, hidden_dim), jnp.float32, -s1, s1),
        "b1": jax.random.uniform(k2, (1, hidden_dim), jnp.float32, -s1, s1),
        "w2": jax.random.uniform(k3, (hidden_dim, num_class), jnp.float32, -s2, s2),
        "b2": jax.random.uniform(k4, (1, num_class), jnp.float32, -s2, s2),
    }


if __name__ == "__main__":
    key = jax.random.PRNGKey(0)
    k_img, k_q, k_p = jax.random.split(key, 3)

    # Small shapes consistent with the module's forward.
    bs = 2
    num_query_tokens = 8
    qformer_hidden_dim = 32
    img_feat_dim = num_query_tokens * qformer_hidden_dim   # 256
    hidden_dim = 256
    num_class = 4

    # Images (NCHW in torch) — only consumed by the external pretrained model.
    images = jax.random.normal(k_img, (bs, 3, 16, 16), jnp.float32)

    # TODO(synk): stand-in for pretrained_model.forward_image(images);
    # synthesize query_output deterministically instead.
    query_output = jax.random.normal(
        k_q, (bs, num_query_tokens, qformer_hidden_dim), jnp.float32
    )

    raw = init_raw_params(k_p, img_feat_dim, hidden_dim, num_class)

    # One-time parameter prep; tk=128 exercises the k-reduction pipeline even
    # at these toy sizes (production shapes would use the budget-derived tk).
    params, cfg = prepare_params(raw["w1"], raw["b1"], raw["w2"], raw["b2"], tk=128)

    logits = classifier_forward(query_output, params, cfg)
    logits = jax.block_until_ready(logits)
    assert logits.shape == (bs, num_class)

    # Reference mirroring the kernel numerics (bf16 streams, f32 accumulation).
    feats = query_output.reshape(bs, -1)
    hp = jax.lax.Precision.HIGHEST
    xb = feats.astype(jnp.bfloat16).astype(jnp.float32)
    w1b = raw["w1"].astype(jnp.bfloat16).astype(jnp.float32)
    h = jnp.dot(xb, w1b, precision=hp) + raw["b1"]
    hb = h.astype(jnp.bfloat16).astype(jnp.float32)
    w2b = raw["w2"].astype(jnp.bfloat16).astype(jnp.float32)
    ref = jnp.dot(hb, w2b, precision=hp) + raw["b2"]
    assert jnp.allclose(logits, ref, atol=2e-3, rtol=2e-3), (
        float(jnp.max(jnp.abs(logits - ref))))

    # Looser sanity check against the pure-f32 reference (bf16 rounding budget).
    h32 = jnp.dot(feats, raw["w1"], precision=hp) + raw["b1"]
    ref32 = jnp.dot(h32, raw["w2"], precision=hp) + raw["b2"]
    assert jnp.allclose(logits, ref32, atol=5e-2, rtol=5e-2)

    print("KERNEL_OK")
</pallas_src>

<mosaic_0001>
module attributes {stable_mosaic.version = 11 : i64} {
  func.func @_classifier_head_kernel(%arg0: i32, %arg1: i32, %arg2: memref<2x128xbf16, #tpu.memory_space<vmem>>, %arg3: memref<128x256xbf16, #tpu.memory_space<vmem>>, %arg4: memref<1x256xf32, #tpu.memory_space<vmem>>, %arg5: memref<256x128xbf16, #tpu.memory_space<vmem>>, %arg6: memref<1x128xf32, #tpu.memory_space<vmem>>, %arg7: memref<2x128xf32, #tpu.memory_space<vmem>>, %arg8: memref<2x256xf32, #tpu.memory_space<vmem>>) attributes {dimension_semantics = [#tpu.dimension_semantics<parallel>, #tpu.dimension_semantics<arbitrary>], iteration_bounds = array<i64: 1, 2>, scalar_prefetch = 0 : i64, scratch_operands = 1 : i64, tpu.core_type = #tpu.core_type<tc>, window_params = [{transform_indices = @transform_0, window_bounds = array<i64: 2, 128>}, {transform_indices = @transform_1, window_bounds = array<i64: 128, 256>}, {transform_indices = @transform_2, window_bounds = array<i64: 1, 256>}, {transform_indices = @transform_3, window_bounds = array<i64: 256, 128>}, {pipeline_mode = #tpu.pipeline_mode<synchronous>, transform_indices = @transform_4, window_bounds = array<i64: 1, 128>}, {pipeline_mode = #tpu.pipeline_mode<synchronous>, transform_indices = @transform_5, window_bounds = array<i64: 2, 128>}]} {
    %c0_i32 = arith.constant 0 : i32
    %0 = arith.cmpi eq, %arg1, %c0_i32 : i32
    %1 = arith.extui %0 : i1 to i32
    %c0_i32_0 = arith.constant 0 : i32
    %2 = arith.cmpi ne, %1, %c0_i32_0 : i32
    scf.if %2 {
      %c0_9 = arith.constant 0 : index
      %c0_10 = arith.constant 0 : index
      %12 = vector.load %arg4[%c0_9, %c0_10] : memref<1x256xf32, #tpu.memory_space<vmem>>, vector<1x256xf32>
      %13 = vector.shape_cast %12 : vector<1x256xf32> to vector<1x256xf32>
      %14 = vector.broadcast %13 : vector<1x256xf32> to vector<2x256xf32>
      %c0_11 = arith.constant 0 : index
      %c0_12 = arith.constant 0 : index
      %15 = vector.load %arg8[%c0_11, %c0_12] : memref<2x256xf32, #tpu.memory_space<vmem>>, vector<2x256xf32>
      tpu.vector_store %arg8[%c0_11, %c0_12], %14 {strides = array<i32>} : memref<2x256xf32, #tpu.memory_space<vmem>>, vector<2x256xf32>,
    } else {
    }
    %c0 = arith.constant 0 : index
    %c0_1 = arith.constant 0 : index
    %3 = vector.load %arg8[%c0, %c0_1] : memref<2x256xf32, #tpu.memory_space<vmem>>, vector<2x256xf32>
    %c0_2 = arith.constant 0 : index
    %c0_3 = arith.constant 0 : index
    %4 = vector.load %arg2[%c0_2, %c0_3] : memref<2x128xbf16, #tpu.memory_space<vmem>>, vector<2x128xbf16>
    %c0_4 = arith.constant 0 : index
    %c0_5 = arith.constant 0 : index
    %5 = vector.load %arg3[%c0_4, %c0_5] : memref<128x256xbf16, #tpu.memory_space<vmem>>, vector<128x256xbf16>
    %cst = arith.constant dense<0.000000e+00> : vector<2x256xf32>
    %6 = tpu.matmul %4, %5, %cst {dimension_numbers = #tpu.dot_dimension_numbers<[1], [0], [0], [1], [0, 0, 1, 1], [], []>} : vector<2x128xbf16>, vector<128x256xbf16>, vector<2x256xf32> -> vector<2x256xf32>
    %7 = arith.addf %3, %6 : vector<2x256xf32>
    %c0_6 = arith.constant 0 : index
    %c0_7 = arith.constant 0 : index
    %8 = vector.load %arg8[%c0_6, %c0_7] : memref<2x256xf32, #tpu.memory_space<vmem>>, vector<2x256xf32>
    tpu.vector_store %arg8[%c0_6, %c0_7], %7 {strides = array<i32>} : memref<2x256xf32, #tpu.memory_space<vmem>>, vector<2x256xf32>,
    %c1_i32 = arith.constant 1 : i32
    %9 = arith.cmpi eq, %arg1, %c1_i32 : i32
    %10 = arith.extui %9 : i1 to i32
    %c0_i32_8 = arith.constant 0 : i32
    %11 = arith.cmpi ne, %10, %c0_i32_8 : i32
    scf.if %11 {
      %c0_9 = arith.constant 0 : index
      %c0_10 = arith.constant 0 : index
      %12 = vector.load %arg8[%c0_9, %c0_10] : memref<2x256xf32, #tpu.memory_space<vmem>>, vector<2x256xf32>
      %13 = arith.truncf %12 : vector<2x256xf32> to vector<2x256xbf16>
      %c0_11 = arith.constant 0 : index
      %c0_12 = arith.constant 0 : index
      %14 = vector.load %arg5[%c0_11, %c0_12] : memref<256x128xbf16, #tpu.memory_space<vmem>>, vector<256x128xbf16>
      %cst_13 = arith.constant dense<0.000000e+00> : vector<2x128xf32>
      %15 = tpu.matmul %13, %14, %cst_13 {dimension_numbers = #tpu.dot_dimension_numbers<[1], [0], [0], [1], [0, 0, 1, 1], [], []>} : vector<2x256xbf16>, vector<256x128xbf16>, vector<2x128xf32> -> vector<2x128xf32>
      %c0_14 = arith.constant 0 : index
      %c0_15 = arith.constant 0 : index
      %16 = vector.load %arg6[%c0_14, %c0_15] : memref<1x128xf32, #tpu.memory_space<vmem>>, vector<1x128xf32>
      %17 = vector.broadcast %16 : vector<1x128xf32> to vector<2x128xf32>
      %18 = arith.addf %15, %17 : vector<2x128xf32>
      %c0_16 = arith.constant 0 : index
      %c0_17 = arith.constant 0 : index
      %19 = vector.load %arg7[%c0_16, %c0_17] : memref<2x128xf32, #tpu.memory_space<vmem>>, vector<2x128xf32>
      tpu.vector_store %arg7[%c0_16, %c0_17], %18 {strides = array<i32>} : memref<2x128xf32, #tpu.memory_space<vmem>>, vector<2x128xf32>,
    } else {
    }
    return
  }
  func.func @transform_0(%arg0: i32, %arg1: i32) -> (i32, i32) {
    %c0_i32 = arith.constant 0 : i32
    %c0_i32_0 = arith.constant 0 : i32
    return %c0_i32, %arg1 : i32, i32
  }
  func.func @transform_1(%arg0: i32, %arg1: i32) -> (i32, i32) {
    %c0_i32 = arith.constant 0 : i32
    return %arg1, %arg0 : i32, i32
  }
  func.func @transform_2(%arg0: i32, %arg1: i32) -> (i32, i32) {
    %c0_i32 = arith.constant 0 : i32
    %c0_i32_0 = arith.constant 0 : i32
    return %c0_i32, %arg0 : i32, i32
  }
  func.func @transform_3(%arg0: i32, %arg1: i32) -> (i32, i32) {
    %c0_i32 = arith.constant 0 : i32
    %c0_i32_0 = arith.constant 0 : i32
    return %arg0, %c0_i32 : i32, i32
  }
  func.func @transform_4(%arg0: i32, %arg1: i32) -> (i32, i32) {
    %c0_i32 = arith.constant 0 : i32
    %c0_i32_0 = arith.constant 0 : i32
    %c0_i32_1 = arith.constant 0 : i32
    return %c0_i32, %c0_i32_0 : i32, i32
  }
  func.func @transform_5(%arg0: i32, %arg1: i32) -> (i32, i32) {
    %c0_i32 = arith.constant 0 : i32
    %c0_i32_0 = arith.constant 0 : i32
    %c0_i32_1 = arith.constant 0 : i32
    return %c0_i32, %c0_i32_0 : i32, i32
  }
}

</mosaic_0001>

<llo_original>
// kernel: tpu_custom_call.1
$region0: #{tpu_custom_call.1}
  #allocation0 [shape = 'u32[]', space=smem, size = 0x4, offset = 0x4, fixed_abs, tag = 'smem constant byte address 0x4 - core index']
  #allocation1 [shape = 'u32[144,128]{1,0:T(1,128)}', space=vmem, size = 0x12000, scoped, tag = 'internal scratch']
  #allocation2 [shape = 'f32[2,256]{1,0:T(2,128)}', space=vmem, size = 0x800, scoped, tag = 'scratch operand']
  %s0 = inlined_call_operand.hbm [shape: bf16[2,256], index: 0, kind: input, shape index: {}]
  %s1 = inlined_call_operand.hbm [shape: bf16[256,256], index: 1, kind: input, shape index: {}]
  %s2 = inlined_call_operand.vmem [shape: f32[1,256], index: 2, kind: input, shape index: {}]
  %s3 = inlined_call_operand.hbm [shape: bf16[256,128], index: 3, kind: input, shape index: {}]
  %s4 = inlined_call_operand.vmem [shape: f32[1,128], index: 4, kind: input, shape index: {}]
  %s5 = inlined_call_operand.hbm [shape: f32[2,128], index: 5, kind: output, shape index: {}]
  %s6 = sld [smem:[#allocation0]]
  $region73: #{tpu_custom_call.1} parent=0
    _
  %s8 = ssub.s32 1, %s6
  %s9 = scalar_select 0, %s8, %s6
  $region1: #{tpu_custom_call.1} parent=0
    #allocation3 [shape = 'u8[1024]{0}', space=vmem, size = 0x400, scoped, tag = 'input window, operand 0']
    #allocation4 [shape = 's32[2]{0}', space=sflag, size = 0x8, scoped, tag = 'scoped memory for tpu_custom_call.1']
    #allocation5 [shape = 's32[2]{0}', space=sflag, size = 0x8, scoped, tag = 'scoped memory for tpu_custom_call.1']
    #allocation6 [shape = 'u8[131072]{0}', space=vmem, size = 0x20000, scoped, tag = 'input window, operand 1']
    #allocation7 [shape = 's32[2]{0}', space=sflag, size = 0x8, scoped, tag = 'scoped memory for tpu_custom_call.1']
    #allocation8 [shape = 'u8[65536]{0}', space=vmem, size = 0x10000, scoped, tag = 'input window, operand 3, single buffered']
    #allocation9 [shape = 'u8[1024]{0}', space=vmem, size = 0x400, scoped, tag = 'output window, operand 0, single buffered']
    %10 = vsyncpa [#allocation4], 0
    %s11 = scalar_lea.sflag [#allocation4], 1
    %12 = vsyncpa %s11, 0
    %13 = vsyncpa [#allocation7], 0
    %s14 = scalar_lea.sflag [#allocation7], 1
    %15 = vsyncpa %s14, 0
    %16 = vsyncpa [#allocation5], 0
    loop: start=0, step=1, limit=4
    $region2: #{tpu_custom_call.1} parent=1 // loop_pre_header
      _
    $region3: #{tpu_custom_call.1} parent=1 // loop_header
      %s18 = sphi 0, %s22
      %p19 = scmp.ge.s32.totalorder %s18, 4
      %s25 = sphi 0, %s37
      %s26 = sphi 0, %s33
      %s27 = sphi 0, %s25
      %s28 = sphi 0, %s26
      %s29 = sphi 0, %s27
      %s30 = sphi 0, %s28
      %s40 = sphi 0, %s42
      %s43 = sphi 0, %s40
      %s44 = sphi 0, %s43
      %s60 = sphi 0, %s44
      %s68 = sphi 0, %s70
      %s71 = sphi 0, %s68
      %s72 = sphi 0, %s71
      %s88 = sphi 0, %s72
      %s94 = sphi 0, %s96
      %s97 = sphi 0, %s94
      %s98 = sphi 0, %s97
      %s114 = sphi 0, %s98
      %s120 = sphi 0, %s122
      %s123 = sphi 0, %s120
      %s124 = sphi 0, %s123
      %s140 = sphi 0, %s124
      %s144 = sphi 0, %s144
      %s146 = sphi 0, %s144
      %s147 = sphi 0, %s146
      %s161 = sphi 0, %s147
      %s165 = sphi 0, %s165
      %s167 = sphi 0, %s165
      %s168 = sphi 0, %s167
      %s182 = sphi 0, %s168
    $region4: #{tpu_custom_call.1} parent=1 // loop_header_branch
      %21 = sbr.rel (%p19) target = $region8
    $region5: #{tpu_custom_call.1} parent=1 // loop_body
      %s23 = ssub.s32 %s18, 1
      %s24 = ssub.s32 %s18, 2
      %s31 = sadd.s32 1, %s26
      %p32 = scmp.ge.s32.totalorder %s31, 2
      %s33 = scalar_select %p32, 0, %s31
      %s34 = sadd.s32 1, %s25
      %s35 = scalar_select %p32, %s34, %s25
      %p36 = scmp.ge.s32.totalorder %s35, 1
      %s37 = scalar_select %p36, 0, %s35
      %s38 = ssub.s32 %s26, %s33
      %p39 = scmp.eq.s32.totalorder %s38, 0
      %s41 = sadd.s32 %s40, 1
      %s42 = scalar_select %p39, %s40, %s41
      %p45 = pneg %p39
      %p46 = scmp.eq.s32.totalorder %s18, 1
      %p47 = por %p45, %p46
      %p48 = scmp.ne.s32.totalorder %s40, %s43
      %p49 = scmp.eq.s32.totalorder %s18, 0
      %p50 = por %p48, %p49
      %p51 = scmp.ne.s32.totalorder %s40, %s43
      %p52 = scmp.eq.s32.totalorder %s23, 1
      %p53 = por %p51, %p52
      %p54 = scmp.ne.s32.totalorder %s43, %s44
      %p55 = scmp.eq.s32.totalorder %s23, 0
      %p56 = por %p54, %p55
      %p57 = scmp.ne.s32.totalorder %s43, %s44
      %p58 = scmp.eq.s32.totalorder %s24, 1
      %p59 = por %p57, %p58
      %p61 = scmp.ne.s32.totalorder %s44, %s60
      %p62 = scmp.eq.s32.totalorder %s24, 0
      %p63 = por %p61, %p62
      %s64 = ssub.s32 %s26, %s33
      %s65 = ssub.s32 %s25, %s37
      %s66 = sor.u32 %s64, %s65
      %p67 = scmp.eq.s32.totalorder %s66, 0
      %s69 = sadd.s32 %s68, 1
      %s70 = scalar_select %p67, %s68, %s69
      %p73 = pneg %p67
      %p74 = scmp.eq.s32.totalorder %s18, 1
      %p75 = por %p73, %p74
      %p76 = scmp.ne.s32.totalorder %s68, %s71
      %p77 = scmp.eq.s32.totalorder %s18, 0
      %p78 = por %p76, %p77
      %p79 = scmp.ne.s32.totalorder %s68, %s71
      %p80 = scmp.eq.s32.totalorder %s23, 1
      %p81 = por %p79, %p80
      %p82 = scmp.ne.s32.totalorder %s71, %s72
      %p83 = scmp.eq.s32.totalorder %s23, 0
      %p84 = por %p82, %p83
      %p85 = scmp.ne.s32.totalorder %s71, %s72
      %p86 = scmp.eq.s32.totalorder %s24, 1
      %p87 = por %p85, %p86
      %p89 = scmp.ne.s32.totalorder %s72, %s88
      %p90 = scmp.eq.s32.totalorder %s24, 0
      %p91 = por %p89, %p90
      %s92 = ssub.s32 %s25, %s37
      %p93 = scmp.eq.s32.totalorder %s92, 0
      %s95 = sadd.s32 %s94, 1
      %s96 = scalar_select %p93, %s94, %s95
      %p99 = pneg %p93
      %p100 = scmp.eq.s32.totalorder %s18, 1
      %p101 = por %p99, %p100
      %p102 = scmp.ne.s32.totalorder %s94, %s97
      %p103 = scmp.eq.s32.totalorder %s18, 0
      %p104 = por %p102, %p103
      %p105 = scmp.ne.s32.totalorder %s94, %s97
      %p106 = scmp.eq.s32.totalorder %s23, 1
      %p107 = por %p105, %p106
      %p108 = scmp.ne.s32.totalorder %s97, %s98
      %p109 = scmp.eq.s32.totalorder %s23, 0
      %p110 = por %p108, %p109
      %p111 = scmp.ne.s32.totalorder %s97, %s98
      %p112 = scmp.eq.s32.totalorder %s24, 1
      %p113 = por %p111, %p112
      %p115 = scmp.ne.s32.totalorder %s98, %s114
      %p116 = scmp.eq.s32.totalorder %s24, 0
      %p117 = por %p115, %p116
      %s118 = ssub.s32 %s25, %s37
      %p119 = scmp.eq.s32.totalorder %s118, 0
      %s121 = sadd.s32 %s120, 1
      %s122 = scalar_select %p119, %s120, %s121
      %p125 = pneg %p119
      %p126 = scmp.eq.s32.totalorder %s18, 1
      %p127 = por %p125, %p126
      %p128 = scmp.ne.s32.totalorder %s120, %s123
      %p129 = scmp.eq.s32.totalorder %s18, 0
      %p130 = por %p128, %p129
      %p131 = scmp.ne.s32.totalorder %s120, %s123
      %p132 = scmp.eq.s32.totalorder %s23, 1
      %p133 = por %p131, %p132
      %p134 = scmp.ne.s32.totalorder %s123, %s124
      %p135 = scmp.eq.s32.totalorder %s23, 0
      %p136 = por %p134, %p135
      %p137 = scmp.ne.s32.totalorder %s123, %s124
      %p138 = scmp.eq.s32.totalorder %s24, 1
      %p139 = por %p137, %p138
      %p141 = scmp.ne.s32.totalorder %s124, %s140
      %p142 = scmp.eq.s32.totalorder %s24, 0
      %p143 = por %p141, %p142
      %s145 = sadd.s32 %s144, 1
      %p148 = scmp.eq.s32.totalorder %s18, 1
      %p149 = scmp.ne.s32.totalorder %s144, %s146
      %p150 = scmp.eq.s32.totalorder %s18, 0
      %p151 = por %p149, %p150
      %p152 = scmp.ne.s32.totalorder %s144, %s146
      %p153 = scmp.eq.s32.totalorder %s23, 1
      %p154 = por %p152, %p153
      %p155 = scmp.ne.s32.totalorder %s146, %s147
      %p156 = scmp.eq.s32.totalorder %s23, 0
      %p157 = por %p155, %p156
      %p158 = scmp.ne.s32.totalorder %s146, %s147
      %p159 = scmp.eq.s32.totalorder %s24, 1
      %p160 = por %p158, %p159
      %p162 = scmp.ne.s32.totalorder %s147, %s161
      %p163 = scmp.eq.s32.totalorder %s24, 0
      %p164 = por %p162, %p163
      %s166 = sadd.s32 %s165, 1
      %p169 = scmp.eq.s32.totalorder %s18, 1
      %p170 = scmp.ne.s32.totalorder %s165, %s167
      %p171 = scmp.eq.s32.totalorder %s18, 0
      %p172 = por %p170, %p171
      %p173 = scmp.ne.s32.totalorder %s165, %s167
      %p174 = scmp.eq.s32.totalorder %s23, 1
      %p175 = por %p173, %p174
      %p176 = scmp.ne.s32.totalorder %s167, %s168
      %p177 = scmp.eq.s32.totalorder %s23, 0
      %p178 = por %p176, %p177
      %p179 = scmp.ne.s32.totalorder %s167, %s168
      %p180 = scmp.eq.s32.totalorder %s24, 1
      %p181 = por %p179, %p180
      %p183 = scmp.ne.s32.totalorder %s168, %s182
      %p184 = scmp.eq.s32.totalorder %s24, 0
      %p185 = por %p183, %p184
      %p186 = scmp.le.s32.totalorder 1, %s18
      %p187 = scmp.lt.s32.totalorder %s18, 3
      %p188 = pnand %p186, %p187
      %p189 = pneg %p188
      // Predicated region
      $region9: #{tpu_custom_call.1} parent=5 // pred_check
        _
      $region10: #{tpu_custom_call.1} parent=5 // pred_check_branch
        %191 = sbr.rel (%p188) target = $region12
      $region11: #{tpu_custom_call.1} parent=5 // pred_region
        %s192 = ssub.s32 %s18, 1
        // Predicated region
        $region13: #{tpu_custom_call.1} parent=11 // pred_check
          %p193 = pneg %p110
        $region14: #{tpu_custom_call.1} parent=11 // pred_check_branch
          %195 = sbr.rel (%p193) target = $region16
        $region15: #{tpu_custom_call.1} parent=11 // pred_region
          %s196 = smul.u32 2, %s27
          %p197 = scmp.lt.s32.totalorder %s196, 1
          %s198 = scalar_select %p197, %s196, 1
          %s199 = scalar_lea.vmem %s2, %s198
          %s200 = smul.u32 2, %s27
        $region16: #{tpu_custom_call.1} parent=11 // pred_fallthru
          _
        // Predicated region
        $region17: #{tpu_custom_call.1} parent=11 // pred_check
          %p201 = pneg %p136
        $region18: #{tpu_custom_call.1} parent=11 // pred_check_branch
          %203 = sbr.rel (%p201) target = $region20
        $region19: #{tpu_custom_call.1} parent=11 // pred_region
          %s204 = smul.u32 32, %s27
          %s206 = ssub.s32 2048, 2048
          %207 = vsyncadd [#allocation7], %s206
          %s208 = smul.addr %s204, 64
          %s209 = scalar_lea.hbm %s3, %s208
          %s210 = sshll.u32 [#allocation8], 4
          %s211 = int_to_ptr.vmem [resolvable:$true] %s210
          %216 = dma.hbm_to_vmem [thread:$0]  %s209, 2048, %s211, [#allocation7], 64, 64, 4
        $region20: #{tpu_custom_call.1} parent=11 // pred_fallthru
          _
        // Predicated region
        $region21: #{tpu_custom_call.1} parent=11 // pred_check
          %p217 = pneg %p157
        $region22: #{tpu_custom_call.1} parent=11 // pred_check_branch
          %219 = sbr.rel (%p217) target = $region24
        $region23: #{tpu_custom_call.1} parent=11 // pred_region
          _
        $region24: #{tpu_custom_call.1} parent=11 // pred_fallthru
          _
      $region12: #{tpu_custom_call.1} parent=5 // pred_fallthru
        _
      %p220 = scmp.lt.s32.totalorder %s18, 2
      // Predicated region
      $region25: #{tpu_custom_call.1} parent=5 // pred_check
        %p221 = pneg %p220
      $region26: #{tpu_custom_call.1} parent=5 // pred_check_branch
        %223 = sbr.rel (%p221) target = $region28
      $region27: #{tpu_custom_call.1} parent=5 // pred_region
        // Predicated region
        $region29: #{tpu_custom_call.1} parent=27 // pred_check
          %p224 = pneg %p50
        $region30: #{tpu_custom_call.1} parent=27 // pred_check_branch
          %226 = sbr.rel (%p224) target = $region32
        $region31: #{tpu_custom_call.1} parent=27 // pred_region
          %s227 = sand.u32 %s40, 1
          %s228 = scalar_lea.sflag [#allocation4], %s227
          %s229 = sand.u32 %s40, 1
          %s230 = scalar_lea.vmem [#allocation3], %s229
          %s232 = ssub.s32 16, 16
          %233 = vsyncadd %s228, %s232
          %s234 = smul.addr %s26, 16
          %s235 = scalar_lea.hbm %s0, %s234
          %s237 = sshll.u32 %s230, 4
          %s238 = int_to_ptr.vmem [resolvable:$true] %s237
          %240 = dma.hbm_to_vmem [thread:$0]  %s235, 16, %s238, %s228
        $region32: #{tpu_custom_call.1} parent=27 // pred_fallthru
          _
        // Predicated region
        $region33: #{tpu_custom_call.1} parent=27 // pred_check
          %p241 = pneg %p78
        $region34: #{tpu_custom_call.1} parent=27 // pred_check_branch
          %243 = sbr.rel (%p241) target = $region36
        $region35: #{tpu_custom_call.1} parent=27 // pred_region
          %s244 = sand.u32 %s18, 1
          %s245 = scalar_lea.sflag [#allocation7], %s244
          %s246 = sand.u32 %s68, 1
          %s247 = smul.addr %s246, 128
          %s248 = scalar_lea.vmem [#allocation6], %s247
          %s249 = smul.u32 16, %s26
          %s250 = smul.u32 2, %s25
          %s252 = ssub.s32 2048, 2048
          %253 = vsyncadd %s245, %s252
          %s254 = smul.addr %s249, 2
          %s255 = sadd.s32 %s250, %s254
          %s256 = smul.addr %s255, 64
          %s257 = scalar_lea.hbm %s1, %s256
          %s258 = sshll.u32 %s248, 4
          %s259 = int_to_ptr.vmem [resolvable:$true] %s258
          %264 = dma.hbm_to_vmem [thread:$0]  %s257, 2048, %s259, %s245, 128, 128, 8
        $region36: #{tpu_custom_call.1} parent=27 // pred_fallthru
          _
      $region28: #{tpu_custom_call.1} parent=5 // pred_fallthru
        _
      %p265 = scmp.le.s32.totalorder 1, %s18
      %p266 = scmp.lt.s32.totalorder %s18, 3
      %p267 = pnand %p265, %p266
      %p268 = pneg %p267
      // Predicated region
      $region37: #{tpu_custom_call.1} parent=5 // pred_check
        _
      $region38: #{tpu_custom_call.1} parent=5 // pred_check_branch
        %270 = sbr.rel (%p267) target = $region40
      $region39: #{tpu_custom_call.1} parent=5 // pred_region
        %s271 = ssub.s32 %s18, 1
        %s272 = sand.u32 %s43, 1
        %s273 = scalar_lea.sflag [#allocation4], %s272
        %s274 = sand.u32 %s43, 1
        %s275 = scalar_lea.vmem [#allocation3], %s274
        // Predicated region
        $region41: #{tpu_custom_call.1} parent=39 // pred_check
          %p276 = pneg %p56
        $region42: #{tpu_custom_call.1} parent=39 // pred_check_branch
          %278 = sbr.rel (%p276) target = $region44
        $region43: #{tpu_custom_call.1} parent=39 // pred_region
          %279 = dma.done %s273, 16
        $region44: #{tpu_custom_call.1} parent=39 // pred_fallthru
          _
        %s280 = sand.u32 %s23, 1
        %s281 = scalar_lea.sflag [#allocation7], %s280
        %s282 = sand.u32 %s71, 1
        %s283 = smul.addr %s282, 128
        %s284 = scalar_lea.vmem [#allocation6], %s283
        // Predicated region
        $region45: #{tpu_custom_call.1} parent=39 // pred_check
          %p285 = pneg %p84
        $region46: #{tpu_custom_call.1} parent=39 // pred_check_branch
          %287 = sbr.rel (%p285) target = $region48
        $region47: #{tpu_custom_call.1} parent=39 // pred_region
          %288 = dma.done %s281, 2048
        $region48: #{tpu_custom_call.1} parent=39 // pred_fallthru
          _
        // Predicated region
        $region49: #{tpu_custom_call.1} parent=39 // pred_check
          %p289 = pneg %p136
        $region50: #{tpu_custom_call.1} parent=39 // pred_check_branch
          %291 = sbr.rel (%p289) target = $region52
        $region51: #{tpu_custom_call.1} parent=39 // pred_region
          %292 = dma.done [#allocation7], 2048
        $region52: #{tpu_custom_call.1} parent=39 // pred_fallthru
          _
        %s293 = sand.u32 %s43, 1
        %s294 = scalar_lea.sflag [#allocation4], %s293
        %s295 = sand.u32 %s43, 1
        %s296 = scalar_lea.vmem [#allocation3], %s295
        %p297 = pneg %p56
        %p298 = pneg %p53
        %s299 = sand.u32 %s23, 1
        %s300 = scalar_lea.sflag [#allocation7], %s299
        %s301 = sand.u32 %s71, 1
        %s302 = smul.addr %s301, 128
        %s303 = scalar_lea.vmem [#allocation6], %s302
        %p304 = pneg %p84
        %p305 = pneg %p81
        %s306 = smul.u32 2, %s27
        %p307 = scmp.lt.s32.totalorder %s306, 1
        %s308 = scalar_select %p307, %s306, 1
        %s309 = scalar_lea.vmem %s2, %s308
        %p310 = pneg %p110
        %p311 = pneg %p107
        %p312 = pneg %p136
        %p313 = pneg %p133
        %p314 = pneg %p157
        %p315 = pneg %p154
        %p316 = pneg %p178
        %p317 = pneg %p175
        %s318 = smul.u32 16, %s28
        %s319 = smul.u32 2, %s27
        %s320 = smul.u32 2, %s27
        %p321 = scmp.lt.s32.totalorder %s320, 1
        %s322 = scalar_select %p321, %s320, 1
        %s323 = scalar_lea.vmem %s2, %s322
        %s324 = smul.u32 2, %s27
        %s325 = smul.u32 32, %s27
        %p327 = scmp.eq.s32.totalorder %s28, 0
        // Predicated region
        $region53: #{tpu_custom_call.1} parent=39 // pred_check
          %p328 = pneg %p327
        $region54: #{tpu_custom_call.1} parent=39 // pred_check_branch
          %330 = sbr.rel (%p328) target = $region56
        $region55: #{tpu_custom_call.1} parent=39 // pred_region
          %v331 = vld [vmem:[%s323] sm:$0x3]
          %v333 = vlaneseq
          %v334 = vshrl.u32 %v333, 7
          %v335 = vsub.s32 0, %v334
          %v336 = vrot.slane %v331, %v335
          %v337 = vlaneseq
          %v338 = vshrl.u32 %v337, 7
          %v339 = vsub.s32 1, %v338
          %v340 = vrot.slane %v331, %v339
          %v341 = vcombine.low %v336, %v340
          %v343 = vunpack.c.l.s4 1983009808
          %v344 = vunpack.c.0.s8 %v343
          %v345 = vlaneseq
          %v346 = vshrl.u32 %v345, 7
          %v347 = vsub.s32 %v344, %v346
          %v348 = vrot.slane %v341, %v347
          %350 = vst [vmem:[#allocation2] sm:$0xf] %v348
        $region56: #{tpu_custom_call.1} parent=39 // pred_fallthru
          _
        %v351 = vld [vmem:[#allocation2] sm:$0xf]
        %v352 = vld [vmem:[%s275] sm:$0x1]
        %v353 = vld [vmem:[%s284] sm:$0xff]
        %v354 = vld [vmem:[%s284 + $0x8] sm:$0xff]
        %v355 = vld [vmem:[%s284 + $0x10] sm:$0xff]
        %v356 = vld [vmem:[%s284 + $0x18] sm:$0xff]
        %v357 = vld [vmem:[%s284 + $0x20] sm:$0xff]
        %v358 = vld [vmem:[%s284 + $0x28] sm:$0xff]
        %v359 = vld [vmem:[%s284 + $0x30] sm:$0xff]
        %v360 = vld [vmem:[%s284 + $0x38] sm:$0xff]
        %v361 = vld [vmem:[%s284 + $0x40] sm:$0xff]
        %v362 = vld [vmem:[%s284 + $0x48] sm:$0xff]
        %v363 = vld [vmem:[%s284 + $0x50] sm:$0xff]
        %v364 = vld [vmem:[%s284 + $0x58] sm:$0xff]
        %v365 = vld [vmem:[%s284 + $0x60] sm:$0xff]
        %v366 = vld [vmem:[%s284 + $0x68] sm:$0xff]
        %v367 = vld [vmem:[%s284 + $0x70] sm:$0xff]
        %v368 = vld [vmem:[%s284 + $0x78] sm:$0xff]
        %v385 = vunpack.c.l.b16 %v353
        %v386 = vunpack.c.h.b16 %v353
        %v387 = vunpack.c.l.b16 %v354
        %v388 = vunpack.c.h.b16 %v354
        %v389 = vunpack.c.l.b16 %v355
        %v390 = vunpack.c.h.b16 %v355
        %v391 = vunpack.c.l.b16 %v356
        %v392 = vunpack.c.h.b16 %v356
        %v393 = vunpack.c.l.b16 %v357
        %v394 = vunpack.c.h.b16 %v357
        %v395 = vunpack.c.l.b16 %v358
        %v396 = vunpack.c.h.b16 %v358
        %v397 = vunpack.c.l.b16 %v359
        %v398 = vunpack.c.h.b16 %v359
        %v399 = vunpack.c.l.b16 %v360
        %v400 = vunpack.c.h.b16 %v360
        %v401 = vunpack.c.l.b16 %v361
        %v402 = vunpack.c.h.b16 %v361
        %v403 = vunpack.c.l.b16 %v362
        %v404 = vunpack.c.h.b16 %v362
        %v405 = vunpack.c.l.b16 %v363
        %v406 = vunpack.c.h.b16 %v363
        %v407 = vunpack.c.l.b16 %v364
        %v408 = vunpack.c.h.b16 %v364
        %v409 = vunpack.c.l.b16 %v365
        %v410 = vunpack.c.h.b16 %v365
        %v411 = vunpack.c.l.b16 %v366
        %v412 = vunpack.c.h.b16 %v366
        %v413 = vunpack.c.l.b16 %v367
        %v414 = vunpack.c.h.b16 %v367
        %v415 = vunpack.c.l.b16 %v368
        %v416 = vunpack.c.h.b16 %v368
        %v417 = vpack.c.b16 %v387, %v385
        %v418 = vpack.c.b16 %v388, %v386
        %v419 = vpack.c.b16 %v391, %v389
        %v420 = vpack.c.b16 %v392, %v390
        %v421 = vpack.c.b16 %v395, %v393
        %v422 = vpack.c.b16 %v396, %v394
        %v423 = vpack.c.b16 %v399, %v397
        %v424 = vpack.c.b16 %v400, %v398
        %v425 = vpack.c.b16 %v403, %v401
        %v426 = vpack.c.b16 %v404, %v402
        %v427 = vpack.c.b16 %v407, %v405
        %v428 = vpack.c.b16 %v408, %v406
        %v429 = vpack.c.b16 %v411, %v409
        %v430 = vpack.c.b16 %v412, %v410
        %v431 = vpack.c.b16 %v415, %v413
        %v432 = vpack.c.b16 %v416, %v414
        %449 = vmatprep.subr.bf16.mxu0 %v418
        %450 = vmatpush1.bf16.msra.mxu0 %v417
        %451 = vmatprep.subr.bf16.mxu0 %v420
        %452 = vmatpush1.bf16.msra.mxu0 %v419
        %453 = vmatprep.subr.bf16.mxu0 %v422
        %454 = vmatpush1.bf16.msra.mxu0 %v421
        %455 = vmatprep.subr.bf16.mxu0 %v424
        %456 = vmatpush1.bf16.msra.mxu0 %v423
        %457 = vmatprep.subr.bf16.mxu0 %v426
        %458 = vmatpush1.bf16.msra.mxu0 %v425
        %459 = vmatprep.subr.bf16.mxu0 %v428
        %460 = vmatpush1.bf16.msra.mxu0 %v427
        %461 = vmatprep.subr.bf16.mxu0 %v430
        %462 = vmatpush1.bf16.msra.mxu0 %v429
        %463 = vmatprep.subr.bf16.mxu0 %v432
        %464 = vmatpush1.bf16.msra.mxu0 %v431
        %465 = vmatprep.subr.bf16.mxu0 0
        %466 = vmatpush1.bf16.msra.mxu0 0
        %467 = vmatprep.subr.bf16.mxu0 0
        %468 = vmatpush1.bf16.msra.mxu0 0
        %469 = vmatprep.subr.bf16.mxu0 0
        %470 = vmatpush1.bf16.msra.mxu0 0
        %471 = vmatprep.subr.bf16.mxu0 0
        %472 = vmatpush1.bf16.msra.mxu0 0
        %473 = vmatprep.subr.bf16.mxu0 0
        %474 = vmatpush1.bf16.msra.mxu0 0
        %475 = vmatprep.subr.bf16.mxu0 0
        %476 = vmatpush1.bf16.msra.mxu0 0
        %477 = vmatprep.subr.bf16.mxu0 0
        %478 = vmatpush1.bf16.msra.mxu0 0
        %479 = vmatprep.subr.bf16.mxu0 0
        %480 = vmatpush1.bf16.msra.mxu0 0
        %481 = vmatprep.mubr.bf16.mxu0 0
        %482 = vmatmul.mubr.bf16.gmra.mrb[0].mxu0 %v352
        %v483 = vpop.f32.mrb[0].mxu0
        %v484 = vadd.f32 0.0, %v483
        %v485 = vpop.f32.mrb[0].mxu0
        %v486 = vadd.f32 0.0, %v485
        %v487 = vpop.f32.mrb[0].mxu0
        %v488 = vpop.f32.mrb[0].mxu0
        %489 = vdwg.mxu0
        %v492 = vcombine.low %v484, %v486
        %v494 = vunpack.c.l.s4 1983009808
        %v495 = vunpack.c.0.s8 %v494
        %v496 = vlaneseq
        %v497 = vshrl.u32 %v496, 7
        %v498 = vsub.s32 %v495, %v497
        %v499 = vrot.slane %v492, %v498
        %v501 = vadd.f32 %v351, %v499
        %502 = vst [vmem:[#allocation2] sm:$0xf] %v501
        %p503 = scmp.eq.s32.totalorder %s28, 1
        // Predicated region
        $region57: #{tpu_custom_call.1} parent=39 // pred_check
          %p504 = pneg %p503
        $region58: #{tpu_custom_call.1} parent=39 // pred_check_branch
          %506 = sbr.rel (%p504) target = $region60
        $region59: #{tpu_custom_call.1} parent=39 // pred_region
          %v507 = vld [vmem:[#allocation2] sm:$0xf]
          %v510 = vunpack.c.l.s4 1983009808
          %v511 = vunpack.c.0.s8 %v510
          %v512 = vlaneseq
          %v513 = vshrl.u32 %v512, 7
          %v514 = vsub.s32 %v511, %v513
          %v515 = vrot.slane %v507, %v514
          %v516 = vcombine.high %v515, %v515
          %v519 = vpack.c.bf16 %v515, %v515
          %v520 = vpack.c.bf16 %v516, %v516
          %v521 = vld [vmem:[#allocation8] sm:$0xf]
          %v522 = vld [vmem:[#allocation8 + $0x4] sm:$0xf]
          %v523 = vld [vmem:[#allocation8 + $0x8] sm:$0xf]
          %v524 = vld [vmem:[#allocation8 + $0xc] sm:$0xf]
          %v525 = vld [vmem:[#allocation8 + $0x10] sm:$0xf]
          %v526 = vld [vmem:[#allocation8 + $0x14] sm:$0xf]
          %v527 = vld [vmem:[#allocation8 + $0x18] sm:$0xf]
          %v528 = vld [vmem:[#allocation8 + $0x1c] sm:$0xf]
          %v529 = vld [vmem:[#allocation8 + $0x20] sm:$0xf]
          %v530 = vld [vmem:[#allocation8 + $0x24] sm:$0xf]
          %v531 = vld [vmem:[#allocation8 + $0x28] sm:$0xf]
          %v532 = vld [vmem:[#allocation8 + $0x2c] sm:$0xf]
          %v533 = vld [vmem:[#allocation8 + $0x30] sm:$0xf]
          %v534 = vld [vmem:[#allocation8 + $0x34] sm:$0xf]
          %v535 = vld [vmem:[#allocation8 + $0x38] sm:$0xf]
          %v536 = vld [vmem:[#allocation8 + $0x3c] sm:$0xf]
          %v537 = vld [vmem:[#allocation8 + $0x40] sm:$0xf]
          %v538 = vld [vmem:[#allocation8 + $0x44] sm:$0xf]
          %v539 = vld [vmem:[#allocation8 + $0x48] sm:$0xf]
          %v540 = vld [vmem:[#allocation8 + $0x4c] sm:$0xf]
          %v541 = vld [vmem:[#allocation8 + $0x50] sm:$0xf]
          %v542 = vld [vmem:[#allocation8 + $0x54] sm:$0xf]
          %v543 = vld [vmem:[#allocation8 + $0x58] sm:$0xf]
          %v544 = vld [vmem:[#allocation8 + $0x5c] sm:$0xf]
          %v545 = vld [vmem:[#allocation8 + $0x60] sm:$0xf]
          %v546 = vld [vmem:[#allocation8 + $0x64] sm:$0xf]
          %v547 = vld [vmem:[#allocation8 + $0x68] sm:$0xf]
          %v548 = vld [vmem:[#allocation8 + $0x6c] sm:$0xf]
          %v549 = vld [vmem:[#allocation8 + $0x70] sm:$0xf]
          %v550 = vld [vmem:[#allocation8 + $0x74] sm:$0xf]
          %v551 = vld [vmem:[#allocation8 + $0x78] sm:$0xf]
          %v552 = vld [vmem:[#allocation8 + $0x7c] sm:$0xf]
          %v553 = vld [vmem:[%s4] sm:$0x1]
          %v555 = vlaneseq
          %v556 = vshrl.u32 %v555, 7
          %v557 = vsub.s32 0, %v556
          %v558 = vrot.slane %v553, %v557
          %v592 = vunpack.c.l.b16 %v521
          %v593 = vunpack.c.l.b16 %v522
          %v594 = vunpack.c.l.b16 %v523
          %v595 = vunpack.c.l.b16 %v524
          %v596 = vunpack.c.l.b16 %v525
          %v597 = vunpack.c.l.b16 %v526
          %v598 = vunpack.c.l.b16 %v527
          %v599 = vunpack.c.l.b16 %v528
          %v600 = vunpack.c.l.b16 %v529
          %v601 = vunpack.c.l.b16 %v530
          %v602 = vunpack.c.l.b16 %v531
          %v603 = vunpack.c.l.b16 %v532
          %v604 = vunpack.c.l.b16 %v533
          %v605 = vunpack.c.l.b16 %v534
          %v606 = vunpack.c.l.b16 %v535
          %v607 = vunpack.c.l.b16 %v536
          %v608 = vunpack.c.l.b16 %v537
          %v609 = vunpack.c.l.b16 %v538
          %v610 = vunpack.c.l.b16 %v539
          %v611 = vunpack.c.l.b16 %v540
          %v612 = vunpack.c.l.b16 %v541
          %v613 = vunpack.c.l.b16 %v542
          %v614 = vunpack.c.l.b16 %v543
          %v615 = vunpack.c.l.b16 %v544
          %v616 = vunpack.c.l.b16 %v545
          %v617 = vunpack.c.l.b16 %v546
          %v618 = vunpack.c.l.b16 %v547
          %v619 = vunpack.c.l.b16 %v548
          %v620 = vunpack.c.l.b16 %v549
          %v621 = vunpack.c.l.b16 %v550
          %v622 = vunpack.c.l.b16 %v551
          %v623 = vunpack.c.l.b16 %v552
          %v624 = vpack.c.b16 %v593, %v592
          %v625 = vpack.c.b16 %v595, %v594
          %v626 = vpack.c.b16 %v597, %v596
          %v627 = vpack.c.b16 %v599, %v598
          %v628 = vpack.c.b16 %v601, %v600
          %v629 = vpack.c.b16 %v603, %v602
          %v630 = vpack.c.b16 %v605, %v604
          %v631 = vpack.c.b16 %v607, %v606
          %v632 = vpack.c.b16 %v609, %v608
          %v633 = vpack.c.b16 %v611, %v610
          %v634 = vpack.c.b16 %v613, %v612
          %v635 = vpack.c.b16 %v615, %v614
          %v636 = vpack.c.b16 %v617, %v616
          %v637 = vpack.c.b16 %v619, %v618
          %v638 = vpack.c.b16 %v621, %v620
          %v639 = vpack.c.b16 %v623, %v622
          %656 = vmatprep.subr.bf16.mxu0 0
          %657 = vmatpush1.bf16.msra.mxu0 %v624
          %658 = vmatprep.subr.bf16.mxu0 0
          %659 = vmatpush1.bf16.msra.mxu0 %v625
          %660 = vmatprep.subr.bf16.mxu0 0
          %661 = vmatpush1.bf16.msra.mxu0 %v626
          %662 = vmatprep.subr.bf16.mxu0 0
          %663 = vmatpush1.bf16.msra.mxu0 %v627
          %664 = vmatprep.subr.bf16.mxu0 0
          %665 = vmatpush1.bf16.msra.mxu0 %v628
          %666 = vmatprep.subr.bf16.mxu0 0
          %667 = vmatpush1.bf16.msra.mxu0 %v629
          %668 = vmatprep.subr.bf16.mxu0 0
          %669 = vmatpush1.bf16.msra.mxu0 %v630
          %670 = vmatprep.subr.bf16.mxu0 0
          %671 = vmatpush1.bf16.msra.mxu0 %v631
          %672 = vmatprep.subr.bf16.mxu0 0
          %673 = vmatpush1.bf16.msra.mxu0 %v632
          %674 = vmatprep.subr.bf16.mxu0 0
          %675 = vmatpush1.bf16.msra.mxu0 %v633
          %676 = vmatprep.subr.bf16.mxu0 0
          %677 = vmatpush1.bf16.msra.mxu0 %v634
          %678 = vmatprep.subr.bf16.mxu0 0
          %679 = vmatpush1.bf16.msra.mxu0 %v635
          %680 = vmatprep.subr.bf16.mxu0 0
          %681 = vmatpush1.bf16.msra.mxu0 %v636
          %682 = vmatprep.subr.bf16.mxu0 0
          %683 = vmatpush1.bf16.msra.mxu0 %v637
          %684 = vmatprep.subr.bf16.mxu0 0
          %685 = vmatpush1.bf16.msra.mxu0 %v638
          %686 = vmatprep.subr.bf16.mxu0 0
          %687 = vmatpush1.bf16.msra.mxu0 %v639
          %688 = vmatprep.mubr.bf16.mxu0 %v520
          %689 = vmatmul.mubr.bf16.gmra.mrb[0].mxu0 %v519
          %v690 = vpop.f32.mrb[0].mxu0
          %v691 = vadd.f32 %v558, %v690
          %v692 = vpop.f32.mrb[0].mxu0
          %v693 = vpop.f32.mrb[0].mxu0
          %v694 = vpop.f32.mrb[0].mxu0
          %695 = vdwg.mxu0
          %696 = vst [vmem:[#allocation9] sm:$0x3] %v691
        $region60: #{tpu_custom_call.1} parent=39 // pred_fallthru
          _
        // Predicated region
        $region61: #{tpu_custom_call.1} parent=39 // pred_check
          %p697 = pneg %p175
        $region62: #{tpu_custom_call.1} parent=39 // pred_check_branch
          %699 = sbr.rel (%p697) target = $region64
        $region63: #{tpu_custom_call.1} parent=39 // pred_region
          %s701 = ssub.s32 32, 32
          %702 = vsyncadd [#allocation5], %s701
          %s704 = sshll.u32 [#allocation9], 4
          %s705 = int_to_ptr.vmem [resolvable:$true] %s704
          %707 = dma.vmem_to_hbm [thread:$0]  %s705, 32, %s5, [#allocation5]
        $region64: #{tpu_custom_call.1} parent=39 // pred_fallthru
          _
        // Predicated region
        $region65: #{tpu_custom_call.1} parent=39 // pred_check
          %p708 = pneg %p175
        $region66: #{tpu_custom_call.1} parent=39 // pred_check_branch
          %710 = sbr.rel (%p708) target = $region68
        $region67: #{tpu_custom_call.1} parent=39 // pred_region
          %711 = dma.done [#allocation5], 32
        $region68: #{tpu_custom_call.1} parent=39 // pred_fallthru
          _
      $region40: #{tpu_custom_call.1} parent=5 // pred_fallthru
        _
      %p712 = scmp.le.s32.totalorder 2, %s18
      // Predicated region
      $region69: #{tpu_custom_call.1} parent=5 // pred_check
        %p713 = pneg %p712
      $region70: #{tpu_custom_call.1} parent=5 // pred_check_branch
        %715 = sbr.rel (%p713) target = $region72
      $region71: #{tpu_custom_call.1} parent=5 // pred_region
        %s716 = ssub.s32 %s18, 2
      $region72: #{tpu_custom_call.1} parent=5 // pred_fallthru
        _
    $region6: #{tpu_custom_call.1} parent=1 // loop_footer
      %s22 = sadd.s32 1, %s18
    $region7: #{tpu_custom_call.1} parent=1 // loop_footer_branch
      %17 = sbr.rel target = $region3
    $region8: #{tpu_custom_call.1} parent=1 // loop_exit
      _
    %717 = vsyncpa [#allocation4], 1
    %s718 = scalar_lea.sflag [#allocation4], 1
    %719 = vsyncpa %s718, 1
    %720 = vsyncpa [#allocation7], 1
    %s721 = scalar_lea.sflag [#allocation7], 1
    %722 = vsyncpa %s721, 1
    %723 = vsyncpa [#allocation5], 1
    %s724 = scalar_lea.sflag [#allocation5], 1
    %725 = vsyncpa %s724, 1

</llo_original>
